<compile_context>
chip_gen: v6e
topology: v6e:2x2x1
jax: 0.10.0
libtpu: 0.0.40
codegen_flags: <defaults>
</compile_context>

<pallas_src>
import functools

import jax
import jax.numpy as jnp
from jax.experimental import pallas as pl
from jax.experimental.pallas import tpu as pltpu


def _masked_softmax(s, mask):
    # s: (TB, L) f32 scores, mask: (TB, L) int32 (nonzero -> masked).
    s = jnp.where(mask != 0, -jnp.inf, s)
    m = jnp.max(s, axis=-1, keepdims=True)
    e = jnp.exp(s - m)                                     # EUP
    denom = jnp.sum(e, axis=-1, keepdims=True)
    # NOTE: a fully-masked row yields NaN, matching PyTorch semantics.
    return e * pl.reciprocal(denom, approx=False)          # exact: keeps 1e-5 tol


def _attention_kernel(x_ref, w_ref, mask_ref, o_ref, *, use_mxu):
    # x_ref:    (TB, L, D) native dtype (f32/bf16) in VMEM
    # w_ref:    (1, D)     weight of nn.Linear(D, 1, bias=False), cast to x dtype
    # mask_ref: (TB, L)    int32, nonzero -> masked with -inf
    # o_ref:    (TB, L)    output probabilities
    if use_mxu:
        # Contract D on the MXU and accumulate in f32.  Avoids the XLU
        # cross-lane reduce (which can saturate before HBM for small D) and the
        # whole-tile f32 upcast for bf16 inputs.
        s = jax.lax.dot_general(
            x_ref[...], w_ref[...],
            dimension_numbers=(((2,), (1,)), ((), ())),
            preferred_element_type=jnp.float32,
        )[..., 0]                                          # (TB, L) f32
    else:
        # Compatibility path (previously validated): VPU multiply + lane reduce.
        x = x_ref[...].astype(jnp.float32)
        w = w_ref[...].astype(jnp.float32)
        s = jnp.sum(x * w[None, :, :], axis=-1)            # (TB, L) f32
    o_ref[...] = _masked_softmax(s, mask_ref[...]).astype(o_ref.dtype)


def _vmem_capacity_bytes():
    try:
        return int(pltpu.get_tpu_info().vmem_capacity_bytes)
    except Exception:
        return 64 * 1024 * 1024            # conservative default (v7x per-core VMEM)


def _choose_block_b(B, L, D, itemsize, budget_bytes):
    """Batch tile: large enough to amortize the ~0.35us/step overhead, small
    enough to double-buffer inside the VMEM budget, and (when alignment allows)
    small enough to give the grid >= 4 steps for v7x megacore sharding."""
    rows_budget = max(1, budget_bytes // max(1, L * D * itemsize))
    rows_target = min(rows_budget, pl.cdiv(B, 4))
    g = 8 if itemsize >= 4 else 16         # sublane tile of the (TB, L) out block (mask is int32)
    tb = max(g, (rows_target // g) * g)
    if tb >= B:
        return B                           # full batch: block == array dims, always legal
    return tb


def _attention_pallas(x, weight, mask, use_mxu):
    B, L, D = x.shape
    itemsize = jnp.dtype(x.dtype).itemsize
    vmem_cap = _vmem_capacity_bytes()
    tb = _choose_block_b(B, L, D, itemsize, budget_bytes=vmem_cap // 4)
    grid = (pl.cdiv(B, tb),)

    weight = weight.astype(x.dtype)        # tiny (1, D); keeps MXU operand dtypes matched
    mask_i32 = mask.astype(jnp.int32)      # mask traffic is ~1/D of x traffic; int32 keeps tiling simple

    cost = pl.CostEstimate(
        flops=2 * B * L * D,
        transcendentals=B * L,
        bytes_accessed=B * L * D * itemsize + B * L * 4 + B * L * itemsize,
    )

    # TODO(synk): for production shapes with L < 128 the (TB, L) score/output
    # slab is not lane-dense (masked vst); the real fix is fusing this kernel
    # into its consumer rather than reshaping the tiny output here.
    return pl.pallas_call(
        functools.partial(_attention_kernel, use_mxu=use_mxu),
        out_shape=jax.ShapeDtypeStruct((B, L), x.dtype),
        grid=grid,
        in_specs=[
            pl.BlockSpec((tb, L, D), lambda b: (b, 0, 0)),   # streamed input (native dtype)
            pl.BlockSpec((1, D), lambda b: (0, 0)),          # weight stays resident
            pl.BlockSpec((tb, L), lambda b: (b, 0)),         # int32 mask
        ],
        out_specs=pl.BlockSpec((tb, L), lambda b: (b, 0)),
        compiler_params=pltpu.CompilerParams(
            dimension_semantics=("parallel",),               # shard batch across TCs (v7x)
            vmem_limit_bytes=(vmem_cap * 3) // 4,            # ~48 MiB v7x, ~96 MiB v5e/v6e
        ),
        cost_estimate=cost,
    )(x, weight, mask_i32)


_MXU_OK = None   # None = untested; set to True/False after the first call.


def attention_forward(x, weight, mask):
    """x: (B, L, D) f32/bf16, weight: (1, D), mask: (B, L) bool/int -> (B, L)."""
    global _MXU_OK
    if _MXU_OK:
        return _attention_pallas(x, weight, mask, use_mxu=True)
    if _MXU_OK is None:
        try:
            out = jax.block_until_ready(_attention_pallas(x, weight, mask, use_mxu=True))
            _MXU_OK = True
            return out
        except Exception:
            # TODO(synk): this Mosaic build cannot lower the rank-3 dot_general /
            # trailing-dim squeeze; fall back to the VPU/XLU compatibility path.
            _MXU_OK = False
    return _attention_pallas(x, weight, mask, use_mxu=False)


def attention_reference(x, weight, mask):
    """Pure-JAX reference mirroring the PyTorch forward."""
    s = jnp.einsum("bld,od->blo", x.astype(jnp.float32),
                   weight.astype(jnp.float32))[..., 0]      # (B, L)
    s = jnp.where(mask, -jnp.inf, s)
    return jax.nn.softmax(s, axis=-1)


if __name__ == "__main__":
    B, L, D = 4, 8, 32
    key = jax.random.PRNGKey(0)
    kx, kw, km = jax.random.split(key, 3)

    x = jax.random.normal(kx, (B, L, D), dtype=jnp.float32)
    # nn.Linear(D, 1, bias=False).weight has shape (1, D), init U(-1/sqrt(D), 1/sqrt(D))
    bound = 1.0 / (D ** 0.5)
    weight = jax.random.uniform(kw, (1, D), minval=-bound, maxval=bound,
                                dtype=jnp.float32)
    # Boolean mask; keep at least one unmasked position per row so softmax is finite.
    mask = jax.random.bernoulli(km, p=0.3, shape=(B, L))
    mask = mask.at[:, 0].set(False)

    out = attention_forward(x, weight, mask)
    out = jax.block_until_ready(out)

    ref = attention_reference(x, weight, mask)
    assert out.shape == (B, L)
    assert jnp.allclose(out.astype(jnp.float32), ref, atol=1e-5, rtol=1e-5), \
        "mismatch vs reference"

    print("KERNEL_OK")
</pallas_src>

<mosaic_0001>
module attributes {stable_mosaic.version = 11 : i64} {
  func.func @_attention_kernel(%arg0: i32, %arg1: memref<4x8x32xf32, #tpu.memory_space<vmem>>, %arg2: memref<1x32xf32, #tpu.memory_space<vmem>>, %arg3: memref<4x8xi32, #tpu.memory_space<vmem>>, %arg4: memref<4x8xf32, #tpu.memory_space<vmem>>) attributes {dimension_semantics = [#tpu.dimension_semantics<parallel>], iteration_bounds = array<i64: 1>, scalar_prefetch = 0 : i64, scratch_operands = 0 : i64, tpu.core_type = #tpu.core_type<tc>, window_params = [{transform_indices = @transform_0, window_bounds = array<i64: 4, 8, 32>}, {pipeline_mode = #tpu.pipeline_mode<synchronous>, transform_indices = @transform_1, window_bounds = array<i64: 1, 32>}, {transform_indices = @transform_2, window_bounds = array<i64: 4, 8>}, {transform_indices = @transform_3, window_bounds = array<i64: 4, 8>}]} {
    %c0 = arith.constant 0 : index
    %c0_0 = arith.constant 0 : index
    %c0_1 = arith.constant 0 : index
    %0 = vector.load %arg1[%c0, %c0_0, %c0_1] : memref<4x8x32xf32, #tpu.memory_space<vmem>>, vector<4x8x32xf32>
    %c0_2 = arith.constant 0 : index
    %c0_3 = arith.constant 0 : index
    %1 = vector.load %arg2[%c0_2, %c0_3] : memref<1x32xf32, #tpu.memory_space<vmem>>, vector<1x32xf32>
    %cst = arith.constant dense<0.000000e+00> : vector<4x8x1xf32>
    %2 = tpu.matmul %0, %1, %cst {dimension_numbers = #tpu.dot_dimension_numbers<[2], [1], [0, 1], [0], [0, 0, 0, 1, 1, 0], [], []>} : vector<4x8x32xf32>, vector<1x32xf32>, vector<4x8x1xf32> -> vector<4x8x1xf32>
    %3 = vector.shape_cast %2 : vector<4x8x1xf32> to vector<4x8xf32>
    %c0_4 = arith.constant 0 : index
    %c0_5 = arith.constant 0 : index
    %4 = vector.load %arg3[%c0_4, %c0_5] : memref<4x8xi32, #tpu.memory_space<vmem>>, vector<4x8xi32>
    %c0_i32 = arith.constant 0 : i32
    %5 = vector.broadcast %c0_i32 : i32 to vector<4x8xi32>
    %6 = arith.cmpi ne, %4, %5 : vector<4x8xi32>
    %cst_6 = arith.constant 0xFF800000 : f32
    %7 = vector.broadcast %cst_6 : f32 to vector<4x8xf32>
    %8 = arith.select %6, %7, %3 : vector<4x8xi1>, vector<4x8xf32>
    %cst_7 = arith.constant dense<0xFF800000> : vector<4xf32>
    %9 = vector.multi_reduction <maximumf>, %8, %cst_7 [1] : vector<4x8xf32> to vector<4xf32>
    %10 = vector.shape_cast %9 : vector<4xf32> to vector<4x1xf32>
    %11 = vector.broadcast %10 : vector<4x1xf32> to vector<4x8xf32>
    %12 = arith.subf %8, %11 : vector<4x8xf32>
    %13 = math.exp %12 : vector<4x8xf32>
    %cst_8 = arith.constant dense<0.000000e+00> : vector<4xf32>
    %14 = vector.multi_reduction <add>, %13, %cst_8 [1] : vector<4x8xf32> to vector<4xf32>
    %15 = vector.shape_cast %14 : vector<4xf32> to vector<4x1xf32>
    %16 = tpu.reciprocal %15 : vector<4x1xf32> -> vector<4x1xf32>
    %17 = vector.broadcast %16 : vector<4x1xf32> to vector<4x8xf32>
    %18 = arith.mulf %13, %17 : vector<4x8xf32>
    %c0_9 = arith.constant 0 : index
    %c0_10 = arith.constant 0 : index
    %19 = vector.load %arg4[%c0_9, %c0_10] : memref<4x8xf32, #tpu.memory_space<vmem>>, vector<4x8xf32>
    tpu.vector_store %arg4[%c0_9, %c0_10], %18 {strides = array<i32>} : memref<4x8xf32, #tpu.memory_space<vmem>>, vector<4x8xf32>,
    return
  }
  func.func @transform_0(%arg0: i32) -> (i32, i32, i32) {
    %c0_i32 = arith.constant 0 : i32
    %c0_i32_0 = arith.constant 0 : i32
    %c0_i32_1 = arith.constant 0 : i32
    return %arg0, %c0_i32, %c0_i32_0 : i32, i32, i32
  }
  func.func @transform_1(%arg0: i32) -> (i32, i32) {
    %c0_i32 = arith.constant 0 : i32
    %c0_i32_0 = arith.constant 0 : i32
    %c0_i32_1 = arith.constant 0 : i32
    return %c0_i32, %c0_i32_0 : i32, i32
  }
  func.func @transform_2(%arg0: i32) -> (i32, i32) {
    %c0_i32 = arith.constant 0 : i32
    %c0_i32_0 = arith.constant 0 : i32
    return %arg0, %c0_i32 : i32, i32
  }
  func.func @transform_3(%arg0: i32) -> (i32, i32) {
    %c0_i32 = arith.constant 0 : i32
    %c0_i32_0 = arith.constant 0 : i32
    return %arg0, %c0_i32 : i32, i32
  }
}

module attributes {stable_mosaic.version = 11 : i64} {
  func.func @_attention_kernel(%arg0: i32, %arg1: memref<4x8x32xf32, #tpu.memory_space<vmem>>, %arg2: memref<1x32xf32, #tpu.memory_space<vmem>>, %arg3: memref<4x8xi32, #tpu.memory_space<vmem>>, %arg4: memref<4x8xf32, #tpu.memory_space<vmem>>) attributes {dimension_semantics = [#tpu.dimension_semantics<parallel>], iteration_bounds = array<i64: 1>, scalar_prefetch = 0 : i64, scratch_operands = 0 : i64, tpu.core_type = #tpu.core_type<tc>, window_params = [{transform_indices = @transform_0, window_bounds = array<i64: 4, 8, 32>}, {pipeline_mode = #tpu.pipeline_mode<synchronous>, transform_indices = @transform_1, window_bounds = array<i64: 1, 32>}, {transform_indices = @transform_2, window_bounds = array<i64: 4, 8>}, {transform_indices = @transform_3, window_bounds = array<i64: 4, 8>}]} {
    %c0 = arith.constant 0 : index
    %c0_0 = arith.constant 0 : index
    %c0_1 = arith.constant 0 : index
    %0 = vector.load %arg1[%c0, %c0_0, %c0_1] : memref<4x8x32xf32, #tpu.memory_space<vmem>>, vector<4x8x32xf32>
    %c0_2 = arith.constant 0 : index
    %c0_3 = arith.constant 0 : index
    %1 = vector.load %arg2[%c0_2, %c0_3] : memref<1x32xf32, #tpu.memory_space<vmem>>, vector<1x32xf32>
    %2 = vector.shape_cast %1 : vector<1x32xf32> to vector<1x1x32xf32>
    %3 = vector.broadcast %2 : vector<1x1x32xf32> to vector<4x8x32xf32>
    %4 = arith.mulf %0, %3 : vector<4x8x32xf32>
    %cst = arith.constant dense<0.000000e+00> : vector<4x8xf32>
    %5 = vector.multi_reduction <add>, %4, %cst [2] : vector<4x8x32xf32> to vector<4x8xf32>
    %c0_4 = arith.constant 0 : index
    %c0_5 = arith.constant 0 : index
    %6 = vector.load %arg3[%c0_4, %c0_5] : memref<4x8xi32, #tpu.memory_space<vmem>>, vector<4x8xi32>
    %c0_i32 = arith.constant 0 : i32
    %7 = vector.broadcast %c0_i32 : i32 to vector<4x8xi32>
    %8 = arith.cmpi ne, %6, %7 : vector<4x8xi32>
    %cst_6 = arith.constant 0xFF800000 : f32
    %9 = vector.broadcast %cst_6 : f32 to vector<4x8xf32>
    %10 = arith.select %8, %9, %5 : vector<4x8xi1>, vector<4x8xf32>
    %cst_7 = arith.constant dense<0xFF800000> : vector<4xf32>
    %11 = vector.multi_reduction <maximumf>, %10, %cst_7 [1] : vector<4x8xf32> to vector<4xf32>
    %12 = vector.shape_cast %11 : vector<4xf32> to vector<4x1xf32>
    %13 = vector.broadcast %12 : vector<4x1xf32> to vector<4x8xf32>
    %14 = arith.subf %10, %13 : vector<4x8xf32>
    %15 = math.exp %14 : vector<4x8xf32>
    %cst_8 = arith.constant dense<0.000000e+00> : vector<4xf32>
    %16 = vector.multi_reduction <add>, %15, %cst_8 [1] : vector<4x8xf32> to vector<4xf32>
    %17 = vector.shape_cast %16 : vector<4xf32> to vector<4x1xf32>
    %18 = tpu.reciprocal %17 : vector<4x1xf32> -> vector<4x1xf32>
    %19 = vector.broadcast %18 : vector<4x1xf32> to vector<4x8xf32>
    %20 = arith.mulf %15, %19 : vector<4x8xf32>
    %c0_9 = arith.constant 0 : index
    %c0_10 = arith.constant 0 : index
    %21 = vector.load %arg4[%c0_9, %c0_10] : memref<4x8xf32, #tpu.memory_space<vmem>>, vector<4x8xf32>
    tpu.vector_store %arg4[%c0_9, %c0_10], %20 {strides = array<i32>} : memref<4x8xf32, #tpu.memory_space<vmem>>, vector<4x8xf32>,
    return
  }
  func.func @transform_0(%arg0: i32) -> (i32, i32, i32) {
    %c0_i32 = arith.constant 0 : i32
    %c0_i32_0 = arith.constant 0 : i32
    %c0_i32_1 = arith.constant 0 : i32
    return %arg0, %c0_i32, %c0_i32_0 : i32, i32, i32
  }
  func.func @transform_1(%arg0: i32) -> (i32, i32) {
    %c0_i32 = arith.constant 0 : i32
    %c0_i32_0 = arith.constant 0 : i32
    %c0_i32_1 = arith.constant 0 : i32
    return %c0_i32, %c0_i32_0 : i32, i32
  }
  func.func @transform_2(%arg0: i32) -> (i32, i32) {
    %c0_i32 = arith.constant 0 : i32
    %c0_i32_0 = arith.constant 0 : i32
    return %arg0, %c0_i32 : i32, i32
  }
  func.func @transform_3(%arg0: i32) -> (i32, i32) {
    %c0_i32 = arith.constant 0 : i32
    %c0_i32_0 = arith.constant 0 : i32
    return %arg0, %c0_i32 : i32, i32
  }
}

</mosaic_0001>

<llo_original>
// kernel: tpu_custom_call.1
$region0: #{tpu_custom_call.1}
  #allocation0 [shape = 'u32[]', space=smem, size = 0x4, offset = 0x4, fixed_abs, tag = 'smem constant byte address 0x4 - core index']
  #allocation1 [shape = 'u32[144,128]{1,0:T(1,128)}', space=vmem, size = 0x12000, scoped, tag = 'internal scratch']
  %s0 = inlined_call_operand.hbm [shape: f32[4,8,32], index: 0, kind: input, shape index: {}]
  %s1 = inlined_call_operand.vmem [shape: f32[1,32], index: 1, kind: input, shape index: {}]
  %s2 = inlined_call_operand.hbm [shape: s32[4,8], index: 2, kind: input, shape index: {}]
  %s3 = inlined_call_operand.hbm [shape: f32[4,8], index: 3, kind: output, shape index: {}]
  %s4 = sld [smem:[#allocation0]]
  $region30: #{tpu_custom_call.1} parent=0
    _
  %s6 = ssub.s32 1, %s4
  %s7 = scalar_select 0, %s6, %s4
  $region1: #{tpu_custom_call.1} parent=0
    #allocation2 [shape = 'u8[16384]{0}', space=vmem, size = 0x4000, scoped, tag = 'input window, operand 0, single buffered']
    #allocation3 [shape = 's32[1]{0}', space=sflag, size = 0x4, scoped, tag = 'scoped memory for tpu_custom_call.1']
    #allocation4 [shape = 's32[1]{0}', space=sflag, size = 0x4, scoped, tag = 'scoped memory for tpu_custom_call.1']
    #allocation5 [shape = 'u8[2048]{0}', space=vmem, size = 0x800, scoped, tag = 'input window, operand 2, single buffered']
    #allocation6 [shape = 's32[1]{0}', space=sflag, size = 0x4, scoped, tag = 'scoped memory for tpu_custom_call.1']
    #allocation7 [shape = 'u8[2048]{0}', space=vmem, size = 0x800, scoped, tag = 'output window, operand 0, single buffered']
    %8 = vsyncpa [#allocation3], 0
    %9 = vsyncpa [#allocation6], 0
    %10 = vsyncpa [#allocation4], 0
    // Predicated region
    $region2: #{tpu_custom_call.1} parent=1 // pred_check
      _
    $region3: #{tpu_custom_call.1} parent=1 // pred_check_branch
      %12 = sbr.rel (0) target = $region5
    $region4: #{tpu_custom_call.1} parent=1 // pred_region
      %s14 = ssub.s32 512, 512
      %15 = vsyncadd [#allocation3], %s14
      %s16 = sshll.u32 [#allocation2], 4
      %s17 = int_to_ptr.vmem [resolvable:$true] %s16
      %22 = dma.hbm_to_vmem [thread:$0]  %s0, 512, %s17, [#allocation3], 128, 128, 8
    $region5: #{tpu_custom_call.1} parent=1 // pred_fallthru
      _
    // Predicated region
    $region6: #{tpu_custom_call.1} parent=1 // pred_check
      _
    $region7: #{tpu_custom_call.1} parent=1 // pred_check_branch
      %24 = sbr.rel (0) target = $region9
    $region8: #{tpu_custom_call.1} parent=1 // pred_region
      _
    $region9: #{tpu_custom_call.1} parent=1 // pred_fallthru
      _
    // Predicated region
    $region10: #{tpu_custom_call.1} parent=1 // pred_check
      _
    $region11: #{tpu_custom_call.1} parent=1 // pred_check_branch
      %26 = sbr.rel (0) target = $region13
    $region12: #{tpu_custom_call.1} parent=1 // pred_region
      %s28 = ssub.s32 64, 64
      %29 = vsyncadd [#allocation6], %s28
      %s31 = sshll.u32 [#allocation5], 4
      %s32 = int_to_ptr.vmem [resolvable:$true] %s31
      %34 = dma.hbm_to_vmem [thread:$0]  %s2, 64, %s32, [#allocation6]
    $region13: #{tpu_custom_call.1} parent=1 // pred_fallthru
      _
    // Predicated region
    $region14: #{tpu_custom_call.1} parent=1 // pred_check
      _
    $region15: #{tpu_custom_call.1} parent=1 // pred_check_branch
      %36 = sbr.rel (0) target = $region17
    $region16: #{tpu_custom_call.1} parent=1 // pred_region
      %37 = dma.done [#allocation3], 512
    $region17: #{tpu_custom_call.1} parent=1 // pred_fallthru
      _
    // Predicated region
    $region18: #{tpu_custom_call.1} parent=1 // pred_check
      _
    $region19: #{tpu_custom_call.1} parent=1 // pred_check_branch
      %39 = sbr.rel (0) target = $region21
    $region20: #{tpu_custom_call.1} parent=1 // pred_region
      %40 = dma.done [#allocation6], 64
    $region21: #{tpu_custom_call.1} parent=1 // pred_fallthru
      _
    %v41 = vld [vmem:[#allocation2] sm:$0xff]
    %v42 = vld [vmem:[#allocation2 + $0x8] sm:$0xff]
    %v43 = vld [vmem:[#allocation2 + $0x10] sm:$0xff]
    %v44 = vld [vmem:[#allocation2 + $0x18] sm:$0xff]
    %v45 = vld [vmem:[%s1] sm:$0x1]
    %v47 = vlaneseq
    %v48 = vshrl.u32 %v47, 7
    %v49 = vsub.s32 0, %v48
    %v50 = vrot.slane %v45, %v49
    %v52 = vmul.f32 %v41, %v50
    %v53 = vmul.f32 %v42, %v50
    %v54 = vmul.f32 %v43, %v50
    %v55 = vmul.f32 %v44, %v50
    %vm56 = vcmask 261120
    %v57 = vsel %vm56, %v52, 0.0
    %58 = vadd.xlane.f32.xlu0 %v57
    %v59 = vpop.xlane.xlu0 %58
    %v60 = vsel %vm56, %v53, 0.0
    %61 = vadd.xlane.f32.xlu0 %v60
    %v62 = vpop.xlane.xlu0 %61
    %v63 = vsel %vm56, %v54, 0.0
    %64 = vadd.xlane.f32.xlu0 %v63
    %v65 = vpop.xlane.xlu0 %64
    %v66 = vsel %vm56, %v55, 0.0
    %67 = vadd.xlane.f32.xlu0 %v66
    %v68 = vpop.xlane.xlu0 %67
    %v69 = vld [vmem:[#allocation5] sm:$0xf]
    %vm70 = vcmp.ne.s32.totalorder %v69, 0
    %v75 = vlaneseq
    %v76 = vand.u32 %v75, 127
    %v77 = vlaneseq
    %v78 = vshrl.u32 %v77, 7
    %v79 = vsub.s32 %v76, %v78
    %v80 = vrot.slane %v59, %v79
    %v81 = vlaneseq
    %v82 = vshrl.u32 %v81, 7
    %v83 = vsub.s32 %v76, %v82
    %v84 = vrot.slane %v62, %v83
    %v85 = vlaneseq
    %v86 = vshrl.u32 %v85, 7
    %v87 = vsub.s32 %v76, %v86
    %v88 = vrot.slane %v65, %v87
    %v89 = vlaneseq
    %v90 = vshrl.u32 %v89, 7
    %v91 = vsub.s32 %v76, %v90
    %v92 = vrot.slane %v68, %v91
    %vm93 = vcmask 1041409
    %v94 = vsel %vm93, %v84, %v80
    %vm95 = vcmask 1042434
    %v96 = vsel %vm95, %v88, %v94
    %vm97 = vcmask 1043459
    %v98 = vsel %vm97, %v92, %v96
    %v100 = vsel %vm70, -inf, %v98
    %vm101 = vcmask 60416
    %v102 = vsel %vm101, %v100, -inf
    %103 = vmax.xlane.f32.xlu0 %v102
    %v104 = vpop.xlane.xlu0 %103
    %v105 = vsub.f32 %v100, %v104
    %v106 = vmul.f32 %v105, 1.442695
    %v107 = vpow.pop %v106
    %v108 = vsel %vm101, %v107, 0.0
    %109 = vadd.xlane.f32.xlu0 %v108
    %v110 = vpop.xlane.xlu0 %109
    %v111 = vrcp.pop %v110
    %v112 = vmul.f32 %v107, %v111
    %113 = vst.msk [vmem:[#allocation7] sm:$0xf] %vm101, %v112
    // Predicated region
    $region22: #{tpu_custom_call.1} parent=1 // pred_check
      _
    $region23: #{tpu_custom_call.1} parent=1 // pred_check_branch
      %115 = sbr.rel (0) target = $region25
    $region24: #{tpu_custom_call.1} parent=1 // pred_region
      %s117 = ssub.s32 64, 64
      %118 = vsyncadd [#allocation4], %s117
      %s120 = sshll.u32 [#allocation7], 4
      %s121 = int_to_ptr.vmem [resolvable:$true] %s120
      %123 = dma.vmem_to_hbm [thread:$0]  %s121, 64, %s3, [#allocation4]
    $region25: #{tpu_custom_call.1} parent=1 // pred_fallthru
      _
    // Predicated region
    $region26: #{tpu_custom_call.1} parent=1 // pred_check
      _
    $region27: #{tpu_custom_call.1} parent=1 // pred_check_branch
      %125 = sbr.rel (0) target = $region29
    $region28: #{tpu_custom_call.1} parent=1 // pred_region
      %126 = dma.done [#allocation4], 64
    $region29: #{tpu_custom_call.1} parent=1 // pred_fallthru
      _
    %127 = vsyncpa [#allocation3], 1
    %128 = vsyncpa [#allocation6], 1
    %129 = vsyncpa [#allocation4], 1

// kernel: tpu_custom_call.1
$region0: #{tpu_custom_call.1}
  #allocation0 [shape = 'u32[]', space=smem, size = 0x4, offset = 0x4, fixed_abs, tag = 'smem constant byte address 0x4 - core index']
  #allocation1 [shape = 'u32[144,128]{1,0:T(1,128)}', space=vmem, size = 0x12000, scoped, tag = 'internal scratch']
  %s0 = inlined_call_operand.hbm [shape: f32[4,8,32], index: 0, kind: input, shape index: {}]
  %s1 = inlined_call_operand.vmem [shape: f32[1,32], index: 1, kind: input, shape index: {}]
  %s2 = inlined_call_operand.hbm [shape: s32[4,8], index: 2, kind: input, shape index: {}]
  %s3 = inlined_call_operand.hbm [shape: f32[4,8], index: 3, kind: output, shape index: {}]
  %s4 = sld [smem:[#allocation0]]
  $region30: #{tpu_custom_call.1} parent=0
    _
  %s6 = ssub.s32 1, %s4
  %s7 = scalar_select 0, %s6, %s4
  $region1: #{tpu_custom_call.1} parent=0
    #allocation2 [shape = 'u8[16384]{0}', space=vmem, size = 0x4000, scoped, tag = 'input window, operand 0, single buffered']
    #allocation3 [shape = 's32[1]{0}', space=sflag, size = 0x4, scoped, tag = 'scoped memory for tpu_custom_call.1']
    #allocation4 [shape = 's32[1]{0}', space=sflag, size = 0x4, scoped, tag = 'scoped memory for tpu_custom_call.1']
    #allocation5 [shape = 'u8[2048]{0}', space=vmem, size = 0x800, scoped, tag = 'input window, operand 2, single buffered']
    #allocation6 [shape = 's32[1]{0}', space=sflag, size = 0x4, scoped, tag = 'scoped memory for tpu_custom_call.1']
    #allocation7 [shape = 'u8[2048]{0}', space=vmem, size = 0x800, scoped, tag = 'output window, operand 0, single buffered']
    %8 = vsyncpa [#allocation3], 0
    %9 = vsyncpa [#allocation6], 0
    %10 = vsyncpa [#allocation4], 0
    // Predicated region
    $region2: #{tpu_custom_call.1} parent=1 // pred_check
      _
    $region3: #{tpu_custom_call.1} parent=1 // pred_check_branch
      %12 = sbr.rel (0) target = $region5
    $region4: #{tpu_custom_call.1} parent=1 // pred_region
      %s14 = ssub.s32 512, 512
      %15 = vsyncadd [#allocation3], %s14
      %s16 = sshll.u32 [#allocation2], 4
      %s17 = int_to_ptr.vmem [resolvable:$true] %s16
      %22 = dma.hbm_to_vmem [thread:$0]  %s0, 512, %s17, [#allocation3], 128, 128, 8
    $region5: #{tpu_custom_call.1} parent=1 // pred_fallthru
      _
    // Predicated region
    $region6: #{tpu_custom_call.1} parent=1 // pred_check
      _
    $region7: #{tpu_custom_call.1} parent=1 // pred_check_branch
      %24 = sbr.rel (0) target = $region9
    $region8: #{tpu_custom_call.1} parent=1 // pred_region
      _
    $region9: #{tpu_custom_call.1} parent=1 // pred_fallthru
      _
    // Predicated region
    $region10: #{tpu_custom_call.1} parent=1 // pred_check
      _
    $region11: #{tpu_custom_call.1} parent=1 // pred_check_branch
      %26 = sbr.rel (0) target = $region13
    $region12: #{tpu_custom_call.1} parent=1 // pred_region
      %s28 = ssub.s32 64, 64
      %29 = vsyncadd [#allocation6], %s28
      %s31 = sshll.u32 [#allocation5], 4
      %s32 = int_to_ptr.vmem [resolvable:$true] %s31
      %34 = dma.hbm_to_vmem [thread:$0]  %s2, 64, %s32, [#allocation6]
    $region13: #{tpu_custom_call.1} parent=1 // pred_fallthru
      _
    // Predicated region
    $region14: #{tpu_custom_call.1} parent=1 // pred_check
      _
    $region15: #{tpu_custom_call.1} parent=1 // pred_check_branch
      %36 = sbr.rel (0) target = $region17
    $region16: #{tpu_custom_call.1} parent=1 // pred_region
      %37 = dma.done [#allocation3], 512
    $region17: #{tpu_custom_call.1} parent=1 // pred_fallthru
      _
    // Predicated region
    $region18: #{tpu_custom_call.1} parent=1 // pred_check
      _
    $region19: #{tpu_custom_call.1} parent=1 // pred_check_branch
      %39 = sbr.rel (0) target = $region21
    $region20: #{tpu_custom_call.1} parent=1 // pred_region
      %40 = dma.done [#allocation6], 64
    $region21: #{tpu_custom_call.1} parent=1 // pred_fallthru
      _
    %v41 = vld [vmem:[#allocation2] sm:$0xff]
    %v42 = vld [vmem:[#allocation2 + $0x8] sm:$0xff]
    %v43 = vld [vmem:[#allocation2 + $0x10] sm:$0xff]
    %v44 = vld [vmem:[#allocation2 + $0x18] sm:$0xff]
    %v45 = vld [vmem:[%s1] sm:$0x1]
    %v47 = vlaneseq
    %v48 = vshrl.u32 %v47, 7
    %v49 = vsub.s32 0, %v48
    %v50 = vrot.slane %v45, %v49
    %v52 = vmul.f32 %v41, %v50
    %v53 = vmul.f32 %v42, %v50
    %v54 = vmul.f32 %v43, %v50
    %v55 = vmul.f32 %v44, %v50
    %vm56 = vcmask 261120
    %v57 = vsel %vm56, %v52, 0.0
    %58 = vadd.xlane.f32.xlu0 %v57
    %v59 = vpop.xlane.xlu0 %58
    %v60 = vsel %vm56, %v53, 0.0
    %61 = vadd.xlane.f32.xlu0 %v60
    %v62 = vpop.xlane.xlu0 %61
    %v63 = vsel %vm56, %v54, 0.0
    %64 = vadd.xlane.f32.xlu0 %v63
    %v65 = vpop.xlane.xlu0 %64
    %v66 = vsel %vm56, %v55, 0.0
    %67 = vadd.xlane.f32.xlu0 %v66
    %v68 = vpop.xlane.xlu0 %67
    %v69 = vld [vmem:[#allocation5] sm:$0xf]
    %vm70 = vcmp.ne.s32.totalorder %v69, 0
    %v75 = vlaneseq
    %v76 = vand.u32 %v75, 127
    %v77 = vlaneseq
    %v78 = vshrl.u32 %v77, 7
    %v79 = vsub.s32 %v76, %v78
    %v80 = vrot.slane %v59, %v79
    %v81 = vlaneseq
    %v82 = vshrl.u32 %v81, 7
    %v83 = vsub.s32 %v76, %v82
    %v84 = vrot.slane %v62, %v83
    %v85 = vlaneseq
    %v86 = vshrl.u32 %v85, 7
    %v87 = vsub.s32 %v76, %v86
    %v88 = vrot.slane %v65, %v87
    %v89 = vlaneseq
    %v90 = vshrl.u32 %v89, 7
    %v91 = vsub.s32 %v76, %v90
    %v92 = vrot.slane %v68, %v91
    %vm93 = vcmask 1041409
    %v94 = vsel %vm93, %v84, %v80
    %vm95 = vcmask 1042434
    %v96 = vsel %vm95, %v88, %v94
    %vm97 = vcmask 1043459
    %v98 = vsel %vm97, %v92, %v96
    %v100 = vsel %vm70, -inf, %v98
    %vm101 = vcmask 60416
    %v102 = vsel %vm101, %v100, -inf
    %103 = vmax.xlane.f32.xlu0 %v102
    %v104 = vpop.xlane.xlu0 %103
    %v105 = vsub.f32 %v100, %v104
    %v106 = vmul.f32 %v105, 1.442695
    %v107 = vpow.pop %v106
    %v108 = vsel %vm101, %v107, 0.0
    %109 = vadd.xlane.f32.xlu0 %v108
    %v110 = vpop.xlane.xlu0 %109
    %v111 = vrcp.pop %v110
    %v112 = vmul.f32 %v107, %v111
    %113 = vst.msk [vmem:[#allocation7] sm:$0xf] %vm101, %v112
    // Predicated region
    $region22: #{tpu_custom_call.1} parent=1 // pred_check
      _
    $region23: #{tpu_custom_call.1} parent=1 // pred_check_branch
      %115 = sbr.rel (0) target = $region25
    $region24: #{tpu_custom_call.1} parent=1 // pred_region
      %s117 = ssub.s32 64, 64
      %118 = vsyncadd [#allocation4], %s117
      %s120 = sshll.u32 [#allocation7], 4
      %s121 = int_to_ptr.vmem [resolvable:$true] %s120
      %123 = dma.vmem_to_hbm [thread:$0]  %s121, 64, %s3, [#allocation4]
    $region25: #{tpu_custom_call.1} parent=1 // pred_fallthru
      _
    // Predicated region
    $region26: #{tpu_custom_call.1} parent=1 // pred_check
      _
    $region27: #{tpu_custom_call.1} parent=1 // pred_check_branch
      %125 = sbr.rel (0) target = $region29
    $region28: #{tpu_custom_call.1} parent=1 // pred_region
      %126 = dma.done [#allocation4], 64
    $region29: #{tpu_custom_call.1} parent=1 // pred_fallthru
      _
    %127 = vsyncpa [#allocation3], 1
    %128 = vsyncpa [#allocation6], 1
    %129 = vsyncpa [#allocation4], 1

</llo_original>
